<compile_context>
chip_gen: v7x
topology: tpu7x:2x2x1
jax: 0.10.0
libtpu: 0.0.40
codegen_flags: <defaults>
</compile_context>

<pallas_src>
import functools

import numpy as np
import jax
import jax.numpy as jnp
from jax.experimental import pallas as pl
from jax.experimental.pallas import tpu as pltpu


def _round_up(x, m):
    return ((x + m - 1) // m) * m


def _weight_norm(v, g):
    # torch.nn.utils.weight_norm with default dim=0 (per-output-row normalization).
    nrm = jnp.sqrt(jnp.sum(v * v, axis=1, keepdims=True))
    return g * v / nrm


# --------------------------------------------------------------------------- #
# Phase 1: fused conditioner MLP -> rank-1 factors (streamed over D_total)
# --------------------------------------------------------------------------- #
def _conditioner_kernel(rows, cols, offs,
                        scale_ref, x_ref, w1t_ref, w2t_ref, b1_ref, b2_ref,
                        colab_ref, rowab_ref,
                        h_scratch, y_scratch):
    k = pl.program_id(0)
    nk = pl.num_programs(0)
    tile_d = w2t_ref.shape[1]

    # First Linear + tanh: computed once, kept resident in VMEM scratch.
    @pl.when(k == 0)
    def _():
        h_scratch[...] = jnp.tanh(
            jnp.dot(x_ref[...], w1t_ref[...],
                    preferred_element_type=jnp.float32) + b1_ref[...])

    # Streamed chunk of the fused second Linear (all five heads in one matmul).
    h = h_scratch[...].astype(w2t_ref.dtype)
    yk = jnp.dot(h, w2t_ref[...],
                 preferred_element_type=jnp.float32) + b2_ref[...]      # (1, tile_d)
    off = pl.multiple_of(k * tile_d, 128)
    y_scratch[:, pl.ds(off, tile_d)] = yk

    # Head slicing / softmax / gate only once, on the final streamed block.
    @pl.when(k == nk - 1)
    def _():
        off_rowa, off_colb, off_rowb, off_norm = offs
        cola = y_scratch[:, 0:cols]                                     # (1, COLS)
        rowa = y_scratch[:, off_rowa:off_rowa + rows]                   # (1, ROWS)
        colb = y_scratch[:, off_colb:off_colb + cols]                   # (1, COLS)
        rowb = y_scratch[:, off_rowb:off_rowb + rows]                   # (1, ROWS)
        norm = y_scratch[:, off_norm:off_norm + 1]                      # (1, 1)

        def _softmax(z):
            z = z - jnp.max(z, axis=-1, keepdims=True)
            ez = jnp.exp(z)
            return ez / jnp.sum(ez, axis=-1, keepdims=True)             # exact divide

        gate = scale_ref[0] * jax.nn.sigmoid(norm)                      # (1, 1)

        # Column factors: lane-dense (2, cols).
        colab_ref[0:1, :] = cola
        colab_ref[1:2, :] = colb
        # Row factors: one small XLU transpose each, pre-scaled by the gate.
        rowab_ref[:, 0:1] = jnp.transpose(_softmax(rowa)) * gate        # (ROWS, 1)
        rowab_ref[:, 1:2] = jnp.transpose(_softmax(rowb)) * gate        # (ROWS, 1)


# --------------------------------------------------------------------------- #
# Phase 2: tiled rank-1 gated update (pure VPU, HBM-bound)
# --------------------------------------------------------------------------- #
def _apply_kernel(grad_ref, colab_ref, rowab_ref, out_ref):
    cola = colab_ref[0:1, :]               # (1, tn)
    colb = colab_ref[1:2, :]               # (1, tn)
    ra = rowab_ref[:, 0:1]                 # (tm, 1) == gate * softmax(rowa)^T
    rb = rowab_ref[:, 1:2]                 # (tm, 1)
    g = grad_ref[...].astype(jnp.float32)
    out_ref[...] = (g * (ra * cola) + rb * colb).astype(out_ref.dtype)


# --------------------------------------------------------------------------- #
# Wrapper-side (one-time) parameter preparation: weight_norm + head fusion.
# --------------------------------------------------------------------------- #
def prepare_conditioned_parameter(params, parameter_shape,
                                  compute_dtype=jnp.bfloat16, d_block=2048):
    """Do this once per weight update, not per forward."""
    rows, cols = parameter_shape
    hid = params["v1"].shape[0]
    assert params["v2"].shape[0] == 2 * (rows + cols) + 1

    w1 = _weight_norm(params["v1"], params["g1"])      # (H, C)
    w2 = _weight_norm(params["v2"], params["g2"])      # (D, H)
    b1, b2 = params["b1"], params["b2"]

    # Pack the five heads side by side, each padded up to a 128-lane boundary.
    seg = [cols, rows, cols, rows, 1]                  # cola, rowa, colb, rowb, norm
    src = np.cumsum([0] + seg)
    pad = [_round_up(s, 128) for s in seg]
    d_pad = int(sum(pad))

    # Phase-1 stream block: multiple of 128 that evenly divides padded D_total.
    d_block_eff = min(_round_up(int(d_block), 128), d_pad)
    d_total = d_pad if d_block_eff == d_pad else _round_up(d_pad, d_block_eff)

    w2_parts, b2_parts = [], []
    for s0, n, npad in zip(src[:-1], seg, pad):
        w2_parts.append(jnp.pad(w2[int(s0):int(s0) + n], ((0, npad - n), (0, 0))))
        b2_parts.append(jnp.pad(b2[int(s0):int(s0) + n], (0, npad - n)))
    w2p = jnp.concatenate(w2_parts, axis=0)            # (d_pad, H)
    b2p = jnp.concatenate(b2_parts)                    # (d_pad,)
    if d_total > d_pad:
        w2p = jnp.pad(w2p, ((0, d_total - d_pad), (0, 0)))
        b2p = jnp.pad(b2p, (0, d_total - d_pad))

    offs = (pad[0],
            pad[0] + pad[1],
            pad[0] + pad[1] + pad[2],
            pad[0] + pad[1] + pad[2] + pad[3])

    return dict(
        w1t=w1.T.astype(compute_dtype),                # (C, H)  bf16 by default
        w2t=w2p.T.astype(compute_dtype),               # (H, D_total)
        b1=b1[None, :].astype(jnp.float32),            # (1, H)
        b2=b2p[None, :].astype(jnp.float32),           # (1, D_total)
        rows=rows, cols=cols, hid=hid,
        d_block=int(d_block_eff), d_total=int(d_total),
        offs=offs, compute_dtype=compute_dtype,
    )


# --------------------------------------------------------------------------- #
# Phase-2 tile selection (v5e/v6e/v7x friendly).
# --------------------------------------------------------------------------- #
def _legal_tile(t, dim, align):
    t = max(1, min(int(t), int(dim)))
    if t == dim:
        return t
    return max(align, (t // align) * align) if dim >= align else dim


def _select_phase2_tiles(rows, cols, grad_itemsize, tile_rows, tile_cols):
    if tile_rows is not None or tile_cols is not None:
        tm = _legal_tile(tile_rows if tile_rows is not None else 512, rows, 8)
        tn = _legal_tile(tile_cols if tile_cols is not None else 1024, cols, 128)
        return tm, tn
    # ~4 MiB grad block: amortizes the ~0.35us/step overhead, well under the
    # v7x 64 MiB physical VMEM budget even with double-buffered in+out blocks.
    target = 4 << 20
    if cols % 128 == 0 and cols <= 2048:
        tn = cols                                       # full-cols row slab
    else:
        tn = _legal_tile(1024, cols, 128)
    tm = _legal_tile(max(1, target // max(1, tn * grad_itemsize)), rows, 8)
    # Feed both TensorCores (v7x megacore): >= 2 blocks along some axis when
    # the parameter is big enough for the split to matter.
    if (pl.cdiv(rows, tm) * pl.cdiv(cols, tn) == 1
            and rows * cols * grad_itemsize >= (1 << 20)):
        if rows >= 16:
            tm = _legal_tile(_round_up((rows + 1) // 2, 8), rows, 8)
        elif cols >= 256:
            tn = _legal_tile(_round_up((cols + 1) // 2, 128), cols, 128)
    return tm, tn


# --------------------------------------------------------------------------- #
# Forward pass.
# --------------------------------------------------------------------------- #
def conditioned_parameter_forward(inputs, grad, prepared, max_scale=1.0,
                                  tile_rows=None, tile_cols=None,
                                  donate_grad=False, small_threshold=1 << 20):
    rows, cols = prepared["rows"], prepared["cols"]
    assert grad.shape == (rows, cols)

    x = inputs.reshape(1, -1).astype(prepared["compute_dtype"])
    cond_dim = x.shape[1]
    hid = prepared["hid"]
    d_block = prepared["d_block"]
    d_total = prepared["d_total"]
    nk = d_total // d_block
    assert x.shape == (1, prepared["w1t"].shape[0])

    scale = jnp.asarray([max_scale], jnp.float32)        # runtime SMEM scalar

    # ---- Phase 1: streamed fused conditioner kernel.
    kern1 = functools.partial(_conditioner_kernel, rows, cols, prepared["offs"])
    w_bytes = (prepared["w1t"].size * np.dtype(prepared["w1t"].dtype).itemsize
               + prepared["w2t"].size * np.dtype(prepared["w2t"].dtype).itemsize)
    p1_bytes = int(w_bytes + x.size * np.dtype(x.dtype).itemsize
                   + (hid + d_total) * 4 + 2 * cols * 4 + rows * 2 * 4)
    colab, rowab = pl.pallas_call(
        kern1,
        out_shape=(jax.ShapeDtypeStruct((2, cols), jnp.float32),
                   jax.ShapeDtypeStruct((rows, 2), jnp.float32)),
        grid=(nk,),
        in_specs=[
            pl.BlockSpec(memory_space=pltpu.MemorySpace.SMEM),        # max_scale
            pl.BlockSpec((1, cond_dim), lambda k: (0, 0)),            # x (resident)
            pl.BlockSpec((cond_dim, hid), lambda k: (0, 0)),          # w1t (resident)
            pl.BlockSpec((hid, d_block), lambda k: (0, k)),           # w2t chunk (streamed)
            pl.BlockSpec((1, hid), lambda k: (0, 0)),                 # b1 (resident)
            pl.BlockSpec((1, d_block), lambda k: (0, k)),             # b2 chunk
        ],
        out_specs=(pl.BlockSpec((2, cols), lambda k: (0, 0)),
                   pl.BlockSpec((rows, 2), lambda k: (0, 0))),
        scratch_shapes=[pltpu.VMEM((1, hid), jnp.float32),
                        pltpu.VMEM((1, d_total), jnp.float32)],
        compiler_params=pltpu.CompilerParams(
            dimension_semantics=("arbitrary",)),
        cost_estimate=pl.CostEstimate(
            flops=int(2 * cond_dim * hid + 2 * hid * d_total + 16 * (rows + cols)),
            transcendentals=int(hid + 2 * rows + 1),
            bytes_accessed=p1_bytes),
    )(scale, x, prepared["w1t"], prepared["w2t"], prepared["b1"], prepared["b2"])

    # ---- Small-parameter fast path: skip the second launch, let XLA fuse.
    if rows * cols < small_threshold:
        ra, rb = rowab[:, 0:1], rowab[:, 1:2]
        return (grad.astype(jnp.float32) * (ra * colab[0:1, :])
                + rb * colab[1:2, :]).astype(grad.dtype)

    # ---- Phase 2: tiled, fully-parallel elementwise update of grad.
    gb = np.dtype(grad.dtype).itemsize
    tm, tn = _select_phase2_tiles(rows, cols, gb, tile_rows, tile_cols)
    grid = (pl.cdiv(rows, tm), pl.cdiv(cols, tn))
    # Double-buffered grad-in + out blocks plus the small factor slabs; sized
    # to stay well inside v7x's 64 MiB physical VMEM (and raise v5e's 16 MiB
    # default scoped limit when needed).
    needed = 4 * tm * tn * gb + 2 * (2 * tn * 4 + tm * 128 * 4)
    vmem_limit = int(min(48 << 20, max(32 << 20, 2 * needed)))
    out = pl.pallas_call(
        _apply_kernel,
        out_shape=jax.ShapeDtypeStruct((rows, cols), grad.dtype),
        grid=grid,
        in_specs=[
            pl.BlockSpec((tm, tn), lambda i, j: (i, j)),   # grad tile
            pl.BlockSpec((2, tn), lambda i, j: (0, j)),    # [cola; colb] column slab
            pl.BlockSpec((tm, 2), lambda i, j: (i, 0)),    # [ra, rb] row slab
        ],
        out_specs=pl.BlockSpec((tm, tn), lambda i, j: (i, j)),
        compiler_params=pltpu.CompilerParams(
            dimension_semantics=("parallel", "parallel"),
            vmem_limit_bytes=vmem_limit),
        cost_estimate=pl.CostEstimate(
            flops=int(4 * rows * cols), transcendentals=0,
            bytes_accessed=int(2 * rows * cols * gb + 2 * cols * 4 + 2 * rows * 4)),
        input_output_aliases={0: 0} if donate_grad else {},
    )(grad, colab, rowab)
    return out


# --------------------------------------------------------------------------- #
# Pure-JAX reference mirroring the PyTorch module exactly.
# --------------------------------------------------------------------------- #
def reference_forward(inputs, grad, params, max_scale=1.0):
    rows, cols = grad.shape
    w1 = _weight_norm(params["v1"], params["g1"])
    w2 = _weight_norm(params["v2"], params["g2"])
    h = jnp.tanh(inputs @ w1.T + params["b1"])
    y = h @ w2.T + params["b2"]
    o1, o2, o3, o4 = cols, cols + rows, 2 * cols + rows, 2 * cols + 2 * rows
    cola, rowa = y[:, :o1], y[:, o1:o2]
    colb, rowb = y[:, o2:o3], y[:, o3:o4]
    norm = y[:, o4:]
    a = jax.nn.softmax(rowa, axis=-1).T @ cola
    b = jax.nn.softmax(rowb, axis=-1).T @ colb
    return max_scale * jnp.squeeze(jax.nn.sigmoid(norm)) * (grad * a + b)


if __name__ == "__main__":
    COND, HID = 256, 128

    def make_case(key, rows, cols):
        D = 2 * (rows + cols) + 1
        ks = jax.random.split(key, 6)
        lim1 = 1.0 / np.sqrt(COND)
        lim2 = 1.0 / np.sqrt(HID)
        v1 = jax.random.uniform(ks[0], (HID, COND), jnp.float32, -lim1, lim1)
        b1 = jax.random.uniform(ks[1], (HID,), jnp.float32, -lim1, lim1)
        v2 = jax.random.uniform(ks[2], (D, HID), jnp.float32, -lim2, lim2)
        b2 = jax.random.uniform(ks[3], (D,), jnp.float32, -lim2, lim2)
        # weight_norm init: g = ||v|| per output row (effective weight == v at init).
        g1 = jnp.linalg.norm(v1, axis=1, keepdims=True)
        g2 = jnp.linalg.norm(v2, axis=1, keepdims=True)
        params = dict(v1=v1, g1=g1, b1=b1, v2=v2, g2=g2, b2=b2)
        inputs = jax.random.normal(ks[4], (1, COND), jnp.float32)
        grad = jax.random.normal(ks[5], (rows, cols), jnp.float32)
        return params, inputs, grad

    key = jax.random.PRNGKey(0)
    k1, k2 = jax.random.split(key)

    # Case 1: (8, 256) parameter, f32 conditioner weights, Pallas Phase 2 forced,
    # explicit tiles -> grid (1, 2) exercises the tiled parallel apply kernel.
    params, inputs, grad = make_case(k1, 8, 256)
    prep_f32 = prepare_conditioned_parameter(params, (8, 256),
                                             compute_dtype=jnp.float32)
    out = conditioned_parameter_forward(inputs, grad, prep_f32, max_scale=1.0,
                                        tile_rows=8, tile_cols=128,
                                        small_threshold=0)
    out = jax.block_until_ready(out)
    ref = reference_forward(inputs, grad, params, max_scale=1.0)
    np.testing.assert_allclose(np.asarray(out), np.asarray(ref),
                               rtol=5e-3, atol=5e-4)

    # Case 2: (16, 384) parameter, default bf16 conditioner weights, small
    # d_block forces a 5-step streamed Phase-1 pipeline; auto Phase-2 tiles.
    params2, inputs2, grad2 = make_case(k2, 16, 384)
    prep_bf16 = prepare_conditioned_parameter(params2, (16, 384), d_block=256)
    out2 = conditioned_parameter_forward(inputs2, grad2, prep_bf16,
                                         max_scale=1.0, small_threshold=0)
    out2 = jax.block_until_ready(out2)
    ref2 = reference_forward(inputs2, grad2, params2, max_scale=1.0)
    np.testing.assert_allclose(np.asarray(out2), np.asarray(ref2),
                               rtol=5e-2, atol=2e-3)

    # Case 3: small-parameter fast path (plain-jnp Phase 2, default threshold).
    out3 = conditioned_parameter_forward(inputs, grad, prep_f32, max_scale=1.0)
    out3 = jax.block_until_ready(out3)
    np.testing.assert_allclose(np.asarray(out3), np.asarray(ref),
                               rtol=5e-3, atol=5e-4)

    print("KERNEL_OK")
</pallas_src>

<mosaic_0001>
module attributes {stable_mosaic.version = 11 : i64} {
  func.func @_conditioner_kernel(%arg0: i32, %arg1: memref<1xf32, #tpu.memory_space<smem>>, %arg2: memref<1x256xf32, #tpu.memory_space<vmem>>, %arg3: memref<256x128xf32, #tpu.memory_space<vmem>>, %arg4: memref<128x896xf32, #tpu.memory_space<vmem>>, %arg5: memref<1x128xf32, #tpu.memory_space<vmem>>, %arg6: memref<1x896xf32, #tpu.memory_space<vmem>>, %arg7: memref<2x256xf32, #tpu.memory_space<vmem>>, %arg8: memref<8x2xf32, #tpu.memory_space<vmem>>, %arg9: memref<1x128xf32, #tpu.memory_space<vmem>>, %arg10: memref<1x896xf32, #tpu.memory_space<vmem>>) attributes {dimension_semantics = [#tpu.dimension_semantics<arbitrary>], iteration_bounds = array<i64: 1>, scalar_prefetch = 0 : i64, scratch_operands = 2 : i64, tpu.core_type = #tpu.core_type<tc>, window_params = [{transform_indices = @transform_0, window_bounds = array<i64: 1>}, {pipeline_mode = #tpu.pipeline_mode<synchronous>, transform_indices = @transform_1, window_bounds = array<i64: 1, 256>}, {pipeline_mode = #tpu.pipeline_mode<synchronous>, transform_indices = @transform_2, window_bounds = array<i64: 256, 128>}, {transform_indices = @transform_3, window_bounds = array<i64: 128, 896>}, {pipeline_mode = #tpu.pipeline_mode<synchronous>, transform_indices = @transform_4, window_bounds = array<i64: 1, 128>}, {transform_indices = @transform_5, window_bounds = array<i64: 1, 896>}, {pipeline_mode = #tpu.pipeline_mode<synchronous>, transform_indices = @transform_6, window_bounds = array<i64: 2, 256>}, {pipeline_mode = #tpu.pipeline_mode<synchronous>, transform_indices = @transform_7, window_bounds = array<i64: 8, 2>}]} {
    %c0_i32 = arith.constant 0 : i32
    %0 = arith.cmpi eq, %arg0, %c0_i32 : i32
    %1 = arith.extui %0 : i1 to i32
    %c0_i32_0 = arith.constant 0 : i32
    %2 = arith.cmpi ne, %1, %c0_i32_0 : i32
    scf.if %2 {
      %c0_9 = arith.constant 0 : index
      %c0_10 = arith.constant 0 : index
      %15 = vector.load %arg2[%c0_9, %c0_10] : memref<1x256xf32, #tpu.memory_space<vmem>>, vector<1x256xf32>
      %c0_11 = arith.constant 0 : index
      %c0_12 = arith.constant 0 : index
      %16 = vector.load %arg3[%c0_11, %c0_12] : memref<256x128xf32, #tpu.memory_space<vmem>>, vector<256x128xf32>
      %cst_13 = arith.constant dense<0.000000e+00> : vector<1x128xf32>
      %17 = tpu.matmul %15, %16, %cst_13 {dimension_numbers = #tpu.dot_dimension_numbers<[1], [0], [0], [1], [0, 0, 1, 1], [], []>} : vector<1x256xf32>, vector<256x128xf32>, vector<1x128xf32> -> vector<1x128xf32>
      %c0_14 = arith.constant 0 : index
      %c0_15 = arith.constant 0 : index
      %18 = vector.load %arg5[%c0_14, %c0_15] : memref<1x128xf32, #tpu.memory_space<vmem>>, vector<1x128xf32>
      %19 = arith.addf %17, %18 : vector<1x128xf32>
      %20 = math.tanh %19 : vector<1x128xf32>
      %c0_16 = arith.constant 0 : index
      %c0_17 = arith.constant 0 : index
      %21 = vector.load %arg9[%c0_16, %c0_17] : memref<1x128xf32, #tpu.memory_space<vmem>>, vector<1x128xf32>
      tpu.vector_store %arg9[%c0_16, %c0_17], %20 {strides = array<i32>} : memref<1x128xf32, #tpu.memory_space<vmem>>, vector<1x128xf32>,
    } else {
    }
    %c0 = arith.constant 0 : index
    %c0_1 = arith.constant 0 : index
    %3 = vector.load %arg9[%c0, %c0_1] : memref<1x128xf32, #tpu.memory_space<vmem>>, vector<1x128xf32>
    %c0_2 = arith.constant 0 : index
    %c0_3 = arith.constant 0 : index
    %4 = vector.load %arg4[%c0_2, %c0_3] : memref<128x896xf32, #tpu.memory_space<vmem>>, vector<128x896xf32>
    %cst = arith.constant dense<0.000000e+00> : vector<1x896xf32>
    %5 = tpu.matmul %3, %4, %cst {dimension_numbers = #tpu.dot_dimension_numbers<[1], [0], [0], [1], [0, 0, 1, 1], [], []>} : vector<1x128xf32>, vector<128x896xf32>, vector<1x896xf32> -> vector<1x896xf32>
    %c0_4 = arith.constant 0 : index
    %c0_5 = arith.constant 0 : index
    %6 = vector.load %arg6[%c0_4, %c0_5] : memref<1x896xf32, #tpu.memory_space<vmem>>, vector<1x896xf32>
    %7 = arith.addf %5, %6 : vector<1x896xf32>
    %c896_i32 = arith.constant 896 : i32
    %8 = arith.muli %arg0, %c896_i32 : i32
    %9 = tpu.assume_multiple %8, 128 : i32
    %c0_6 = arith.constant 0 : index
    %10 = arith.index_cast %9 : i32 to index
    %11 = vector.load %arg10[%c0_6, %10] : memref<1x896xf32, #tpu.memory_space<vmem>>, vector<1x896xf32>
    tpu.vector_store %arg10[%c0_6, %10], %7 {strides = array<i32>} : memref<1x896xf32, #tpu.memory_space<vmem>>, vector<1x896xf32>,
    %c0_i32_7 = arith.constant 0 : i32
    %12 = arith.cmpi eq, %arg0, %c0_i32_7 : i32
    %13 = arith.extui %12 : i1 to i32
    %c0_i32_8 = arith.constant 0 : i32
    %14 = arith.cmpi ne, %13, %c0_i32_8 : i32
    scf.if %14 {
      %c0_9 = arith.constant 0 : index
      %c0_10 = arith.constant 0 : index
      %15 = vector.load %arg10[%c0_9, %c0_10] : memref<1x896xf32, #tpu.memory_space<vmem>>, vector<1x256xf32>
      %c0_11 = arith.constant 0 : index
      %c256 = arith.constant 256 : index
      %16 = vector.load %arg10[%c0_11, %c256] : memref<1x896xf32, #tpu.memory_space<vmem>>, vector<1x8xf32>
      %c0_12 = arith.constant 0 : index
      %c384 = arith.constant 384 : index
      %17 = vector.load %arg10[%c0_12, %c384] : memref<1x896xf32, #tpu.memory_space<vmem>>, vector<1x256xf32>
      %c0_13 = arith.constant 0 : index
      %c640 = arith.constant 640 : index
      %18 = vector.load %arg10[%c0_13, %c640] : memref<1x896xf32, #tpu.memory_space<vmem>>, vector<1x8xf32>
      %c0_14 = arith.constant 0 : index
      %c768 = arith.constant 768 : index
      %19 = vector.load %arg10[%c0_14, %c768] : memref<1x896xf32, #tpu.memory_space<vmem>>, vector<1x1xf32>
      %c0_15 = arith.constant 0 : index
      %20 = memref.load %arg1[%c0_15] : memref<1xf32, #tpu.memory_space<smem>>
      %21 = arith.negf %19 : vector<1x1xf32>
      %22 = math.exp %21 : vector<1x1xf32>
      %cst_16 = arith.constant 1.000000e+00 : f32
      %23 = vector.broadcast %cst_16 : f32 to vector<1x1xf32>
      %24 = arith.addf %23, %22 : vector<1x1xf32>
      %25 = arith.divf %23, %24 : vector<1x1xf32>
      %26 = vector.broadcast %20 : f32 to vector<1x1xf32>
      %27 = arith.mulf %26, %25 : vector<1x1xf32>
      %c0_17 = arith.constant 0 : index
      %c0_18 = arith.constant 0 : index
      %28 = vector.load %arg7[%c0_17, %c0_18] : memref<2x256xf32, #tpu.memory_space<vmem>>, vector<1x256xf32>
      tpu.vector_store %arg7[%c0_17, %c0_18], %15 {strides = array<i32>} : memref<2x256xf32, #tpu.memory_space<vmem>>, vector<1x256xf32>,
      %c1 = arith.constant 1 : index
      %c0_19 = arith.constant 0 : index
      %29 = vector.load %arg7[%c1, %c0_19] : memref<2x256xf32, #tpu.memory_space<vmem>>, vector<1x256xf32>
      tpu.vector_store %arg7[%c1, %c0_19], %17 {strides = array<i32>} : memref<2x256xf32, #tpu.memory_space<vmem>>, vector<1x256xf32>,
      %cst_20 = arith.constant dense<0xFF800000> : vector<1xf32>
      %30 = vector.multi_reduction <maximumf>, %16, %cst_20 [1] : vector<1x8xf32> to vector<1xf32>
      %31 = vector.shape_cast %30 : vector<1xf32> to vector<1x1xf32>
      %32 = vector.broadcast %31 : vector<1x1xf32> to vector<1x8xf32>
      %33 = arith.subf %16, %32 : vector<1x8xf32>
      %34 = math.exp %33 : vector<1x8xf32>
      %cst_21 = arith.constant dense<0.000000e+00> : vector<1xf32>
      %35 = vector.multi_reduction <add>, %34, %cst_21 [1] : vector<1x8xf32> to vector<1xf32>
      %36 = vector.shape_cast %35 : vector<1xf32> to vector<1x1xf32>
      %37 = vector.broadcast %36 : vector<1x1xf32> to vector<1x8xf32>
      %38 = arith.divf %34, %37 : vector<1x8xf32>
      %39 = tpu.transpose %38, [1, 0] : vector<1x8xf32> -> vector<8x1xf32>
      %40 = vector.broadcast %27 : vector<1x1xf32> to vector<8x1xf32>
      %41 = arith.mulf %39, %40 : vector<8x1xf32>
      %c0_22 = arith.constant 0 : index
      %c0_23 = arith.constant 0 : index
      %42 = vector.load %arg8[%c0_22, %c0_23] : memref<8x2xf32, #tpu.memory_space<vmem>>, vector<8x1xf32>
      tpu.vector_store %arg8[%c0_22, %c0_23], %41 {strides = array<i32>} : memref<8x2xf32, #tpu.memory_space<vmem>>, vector<8x1xf32>,
      %cst_24 = arith.constant dense<0xFF800000> : vector<1xf32>
      %43 = vector.multi_reduction <maximumf>, %18, %cst_24 [1] : vector<1x8xf32> to vector<1xf32>
      %44 = vector.shape_cast %43 : vector<1xf32> to vector<1x1xf32>
      %45 = vector.broadcast %44 : vector<1x1xf32> to vector<1x8xf32>
      %46 = arith.subf %18, %45 : vector<1x8xf32>
      %47 = math.exp %46 : vector<1x8xf32>
      %cst_25 = arith.constant dense<0.000000e+00> : vector<1xf32>
      %48 = vector.multi_reduction <add>, %47, %cst_25 [1] : vector<1x8xf32> to vector<1xf32>
      %49 = vector.shape_cast %48 : vector<1xf32> to vector<1x1xf32>
      %50 = vector.broadcast %49 : vector<1x1xf32> to vector<1x8xf32>
      %51 = arith.divf %47, %50 : vector<1x8xf32>
      %52 = tpu.transpose %51, [1, 0] : vector<1x8xf32> -> vector<8x1xf32>
      %53 = vector.broadcast %27 : vector<1x1xf32> to vector<8x1xf32>
      %54 = arith.mulf %52, %53 : vector<8x1xf32>
      %c0_26 = arith.constant 0 : index
      %c1_27 = arith.constant 1 : index
      %55 = vector.load %arg8[%c0_26, %c1_27] : memref<8x2xf32, #tpu.memory_space<vmem>>, vector<8x1xf32>
      tpu.vector_store %arg8[%c0_26, %c1_27], %54 {strides = array<i32>} : memref<8x2xf32, #tpu.memory_space<vmem>>, vector<8x1xf32>,
    } else {
    }
    return
  }
  func.func @transform_0(%arg0: i32) -> i32 {
    %c0_i32 = arith.constant 0 : i32
    %c0_i32_0 = arith.constant 0 : i32
    return %c0_i32 : i32
  }
  func.func @transform_1(%arg0: i32) -> (i32, i32) {
    %c0_i32 = arith.constant 0 : i32
    %c0_i32_0 = arith.constant 0 : i32
    %c0_i32_1 = arith.constant 0 : i32
    return %c0_i32, %c0_i32_0 : i32, i32
  }
  func.func @transform_2(%arg0: i32) -> (i32, i32) {
    %c0_i32 = arith.constant 0 : i32
    %c0_i32_0 = arith.constant 0 : i32
    %c0_i32_1 = arith.constant 0 : i32
    return %c0_i32, %c0_i32_0 : i32, i32
  }
  func.func @transform_3(%arg0: i32) -> (i32, i32) {
    %c0_i32 = arith.constant 0 : i32
    %c0_i32_0 = arith.constant 0 : i32
    return %c0_i32, %arg0 : i32, i32
  }
  func.func @transform_4(%arg0: i32) -> (i32, i32) {
    %c0_i32 = arith.constant 0 : i32
    %c0_i32_0 = arith.constant 0 : i32
    %c0_i32_1 = arith.constant 0 : i32
    return %c0_i32, %c0_i32_0 : i32, i32
  }
  func.func @transform_5(%arg0: i32) -> (i32, i32) {
    %c0_i32 = arith.constant 0 : i32
    %c0_i32_0 = arith.constant 0 : i32
    return %c0_i32, %arg0 : i32, i32
  }
  func.func @transform_6(%arg0: i32) -> (i32, i32) {
    %c0_i32 = arith.constant 0 : i32
    %c0_i32_0 = arith.constant 0 : i32
    %c0_i32_1 = arith.constant 0 : i32
    return %c0_i32, %c0_i32_0 : i32, i32
  }
  func.func @transform_7(%arg0: i32) -> (i32, i32) {
    %c0_i32 = arith.constant 0 : i32
    %c0_i32_0 = arith.constant 0 : i32
    %c0_i32_1 = arith.constant 0 : i32
    return %c0_i32, %c0_i32_0 : i32, i32
  }
}

</mosaic_0001>

<llo_original>
// kernel: tpu_custom_call.1
$region0: #{tpu_custom_call.1}
  #allocation0 [shape = 'u32[]', space=smem, size = 0x4, offset = 0x4, fixed_abs, tag = 'smem constant byte address 0x4 - core index']
  #allocation1 [shape = 'u32[144,128]{1,0:T(1,128)}', space=vmem, size = 0x12000, scoped, tag = 'internal scratch']
  #allocation2 [shape = 'f32[1,128]{1,0:T(1,128)}', space=vmem, size = 0x200, scoped, tag = 'scratch operand']
  #allocation3 [shape = 'f32[1,896]{1,0:T(1,128)}', space=vmem, size = 0xe00, scoped, tag = 'scratch operand']
  #allocation4 [shape = 'f32[1]{0:T(128)S(6)}', space=smem, size = 0x200, scoped, tag = 'scoped memory for tpu_custom_call.1']
  %s0 = inlined_call_operand.<no memory space> [shape: f32[1], index: 0, kind: input, shape index: {}]
  %s1 = inlined_call_operand.vmem [shape: f32[1,256], index: 1, kind: input, shape index: {}]
  %s2 = inlined_call_operand.hbm [shape: f32[256,128], index: 2, kind: input, shape index: {}]
  %s3 = inlined_call_operand.hbm [shape: f32[128,896], index: 3, kind: input, shape index: {}]
  %s4 = inlined_call_operand.vmem [shape: f32[1,128], index: 4, kind: input, shape index: {}]
  %s5 = inlined_call_operand.vmem [shape: f32[1,896], index: 5, kind: input, shape index: {}]
  %s6 = inlined_call_operand.hbm [shape: f32[2,256], index: 6, kind: output, shape index: {0}]
  %s7 = inlined_call_operand.vmem [shape: f32[8,2], index: 7, kind: output, shape index: {1}]
  %8 = xla_tuple %s6, %s7
  %s9 = sld [smem:[#allocation0]]
  $region58: #{tpu_custom_call.1} parent=0
    _
  %s11 = ssub.s32 1, %s9
  %s12 = scalar_select 0, %s11, %s9
  %13 = sst [smem:[#allocation4]] %s0
  $region1: #{tpu_custom_call.1} parent=0
    #allocation5 [shape = 'u8[131072]{0}', space=vmem, size = 0x20000, scoped, tag = 'input window, operand 2, single buffered']
    #allocation6 [shape = 's32[1]{0}', space=sflag, size = 0x4, scoped, tag = 'scoped memory for tpu_custom_call.1']
    #allocation7 [shape = 's32[1]{0}', space=sflag, size = 0x4, scoped, tag = 'scoped memory for tpu_custom_call.1']
    #allocation8 [shape = 'u8[458752]{0}', space=vmem, size = 0x70000, scoped, tag = 'input window, operand 3, single buffered']
    #allocation9 [shape = 's32[1]{0}', space=sflag, size = 0x4, scoped, tag = 'scoped memory for tpu_custom_call.1']
    #allocation10 [shape = 'u8[2048]{0}', space=vmem, size = 0x800, scoped, tag = 'output window, operand 0, single buffered']
    %14 = vsyncpa [#allocation6], 0
    %15 = vsyncpa [#allocation9], 0
    %16 = vsyncpa [#allocation7], 0
    // Predicated region
    $region2: #{tpu_custom_call.1} parent=1 // pred_check
      _
    $region3: #{tpu_custom_call.1} parent=1 // pred_check_branch
      %18 = sbr.rel (0) target = $region5
    $region4: #{tpu_custom_call.1} parent=1 // pred_region
      _
    $region5: #{tpu_custom_call.1} parent=1 // pred_fallthru
      _
    // Predicated region
    $region6: #{tpu_custom_call.1} parent=1 // pred_check
      _
    $region7: #{tpu_custom_call.1} parent=1 // pred_check_branch
      %20 = sbr.rel (0) target = $region9
    $region8: #{tpu_custom_call.1} parent=1 // pred_region
      _
    $region9: #{tpu_custom_call.1} parent=1 // pred_fallthru
      _
    // Predicated region
    $region10: #{tpu_custom_call.1} parent=1 // pred_check
      _
    $region11: #{tpu_custom_call.1} parent=1 // pred_check_branch
      %22 = sbr.rel (0) target = $region13
    $region12: #{tpu_custom_call.1} parent=1 // pred_region
      %s24 = ssub.s32 4096, 4096
      %25 = vsyncadd [#allocation6], %s24
      %s26 = sshll.u32 [#allocation5], 4
      %s27 = int_to_ptr.vmem [resolvable:$true] %s26
      %32 = dma.hbm_to_vmem [thread:$0]  %s2, 4096, %s27, [#allocation6], 128, 128, 8
    $region13: #{tpu_custom_call.1} parent=1 // pred_fallthru
      _
    // Predicated region
    $region14: #{tpu_custom_call.1} parent=1 // pred_check
      _
    $region15: #{tpu_custom_call.1} parent=1 // pred_check_branch
      %34 = sbr.rel (0) target = $region17
    $region16: #{tpu_custom_call.1} parent=1 // pred_region
      %s36 = ssub.s32 14336, 14336
      %37 = vsyncadd [#allocation9], %s36
      %s38 = sshll.u32 [#allocation8], 4
      %s39 = int_to_ptr.vmem [resolvable:$true] %s38
      %44 = dma.hbm_to_vmem [thread:$0]  %s3, 14336, %s39, [#allocation9], 896, 896, 56
    $region17: #{tpu_custom_call.1} parent=1 // pred_fallthru
      _
    // Predicated region
    $region18: #{tpu_custom_call.1} parent=1 // pred_check
      _
    $region19: #{tpu_custom_call.1} parent=1 // pred_check_branch
      %46 = sbr.rel (0) target = $region21
    $region20: #{tpu_custom_call.1} parent=1 // pred_region
      _
    $region21: #{tpu_custom_call.1} parent=1 // pred_fallthru
      _
    // Predicated region
    $region22: #{tpu_custom_call.1} parent=1 // pred_check
      _
    $region23: #{tpu_custom_call.1} parent=1 // pred_check_branch
      %48 = sbr.rel (0) target = $region25
    $region24: #{tpu_custom_call.1} parent=1 // pred_region
      _
    $region25: #{tpu_custom_call.1} parent=1 // pred_fallthru
      _
    // Predicated region
    $region26: #{tpu_custom_call.1} parent=1 // pred_check
      _
    $region27: #{tpu_custom_call.1} parent=1 // pred_check_branch
      %50 = sbr.rel (0) target = $region29
    $region28: #{tpu_custom_call.1} parent=1 // pred_region
      %51 = dma.done [#allocation6], 4096
    $region29: #{tpu_custom_call.1} parent=1 // pred_fallthru
      _
    // Predicated region
    $region30: #{tpu_custom_call.1} parent=1 // pred_check
      _
    $region31: #{tpu_custom_call.1} parent=1 // pred_check_branch
      %53 = sbr.rel (0) target = $region33
    $region32: #{tpu_custom_call.1} parent=1 // pred_region
      %54 = dma.done [#allocation9], 14336
    $region33: #{tpu_custom_call.1} parent=1 // pred_fallthru
      _
    %p55 = scmp.eq.s32.totalorder 0, 0
    // Predicated region
    $region34: #{tpu_custom_call.1} parent=1 // pred_check
      %p56 = pneg %p55
    $region35: #{tpu_custom_call.1} parent=1 // pred_check_branch
      %58 = sbr.rel (%p56) target = $region37
    $region36: #{tpu_custom_call.1} parent=1 // pred_region
      %v59 = vld [vmem:[%s1] sm:$0x3]
      %v60 = vld [vmem:[#allocation5] sm:$0xff]
      %v61 = vld [vmem:[#allocation5 + $0x8] sm:$0xff]
      %v62 = vld [vmem:[#allocation5 + $0x10] sm:$0xff]
      %v63 = vld [vmem:[#allocation5 + $0x18] sm:$0xff]
      %v64 = vld [vmem:[#allocation5 + $0x20] sm:$0xff]
      %v65 = vld [vmem:[#allocation5 + $0x28] sm:$0xff]
      %v66 = vld [vmem:[#allocation5 + $0x30] sm:$0xff]
      %v67 = vld [vmem:[#allocation5 + $0x38] sm:$0xff]
      %v68 = vld [vmem:[#allocation5 + $0x40] sm:$0xff]
      %v69 = vld [vmem:[#allocation5 + $0x48] sm:$0xff]
      %v70 = vld [vmem:[#allocation5 + $0x50] sm:$0xff]
      %v71 = vld [vmem:[#allocation5 + $0x58] sm:$0xff]
      %v72 = vld [vmem:[#allocation5 + $0x60] sm:$0xff]
      %v73 = vld [vmem:[#allocation5 + $0x68] sm:$0xff]
      %v74 = vld [vmem:[#allocation5 + $0x70] sm:$0xff]
      %v75 = vld [vmem:[#allocation5 + $0x78] sm:$0xff]
      %v76 = vld [vmem:[#allocation5 + $0x80] sm:$0xff]
      %v77 = vld [vmem:[#allocation5 + $0x88] sm:$0xff]
      %v78 = vld [vmem:[#allocation5 + $0x90] sm:$0xff]
      %v79 = vld [vmem:[#allocation5 + $0x98] sm:$0xff]
      %v80 = vld [vmem:[#allocation5 + $0xa0] sm:$0xff]
      %v81 = vld [vmem:[#allocation5 + $0xa8] sm:$0xff]
      %v82 = vld [vmem:[#allocation5 + $0xb0] sm:$0xff]
      %v83 = vld [vmem:[#allocation5 + $0xb8] sm:$0xff]
      %v84 = vld [vmem:[#allocation5 + $0xc0] sm:$0xff]
      %v85 = vld [vmem:[#allocation5 + $0xc8] sm:$0xff]
      %v86 = vld [vmem:[#allocation5 + $0xd0] sm:$0xff]
      %v87 = vld [vmem:[#allocation5 + $0xd8] sm:$0xff]
      %v88 = vld [vmem:[#allocation5 + $0xe0] sm:$0xff]
      %v89 = vld [vmem:[#allocation5 + $0xe8] sm:$0xff]
      %v90 = vld [vmem:[#allocation5 + $0xf0] sm:$0xff]
      %v91 = vld [vmem:[#allocation5 + $0xf8] sm:$0xff]
      %v92 = vld [vmem:[%s4] sm:$0x1]
      %v94 = vlaneseq
      %v95 = vshrl.u32 %v94, 7
      %v96 = vsub.s32 0, %v95
      %v97 = vrot.slane %v59, %v96
      %v98 = vlaneseq
      %v99 = vshrl.u32 %v98, 7
      %v100 = vsub.s32 1, %v99
      %v101 = vrot.slane %v59, %v100
      %104 = vmatprep.subr.mxu0 0.0
      %105 = vmatpush1.msra.mxu0 %v60
      %106 = vmatprep.subr.mxu0 0.0
      %107 = vmatpush1.msra.mxu0 %v61
      %108 = vmatprep.subr.mxu0 0.0
      %109 = vmatpush1.msra.mxu0 %v62
      %110 = vmatprep.subr.mxu0 0.0
      %111 = vmatpush1.msra.mxu0 %v63
      %112 = vmatprep.subr.mxu0 0.0
      %113 = vmatpush1.msra.mxu0 %v64
      %114 = vmatprep.subr.mxu0 0.0
      %115 = vmatpush1.msra.mxu0 %v65
      %116 = vmatprep.subr.mxu0 0.0
      %117 = vmatpush1.msra.mxu0 %v66
      %118 = vmatprep.subr.mxu0 0.0
      %119 = vmatpush1.msra.mxu0 %v67
      %120 = vmatprep.subr.mxu0 0.0
      %121 = vmatpush1.msra.mxu0 %v68
      %122 = vmatprep.subr.mxu0 0.0
      %123 = vmatpush1.msra.mxu0 %v69
      %124 = vmatprep.subr.mxu0 0.0
      %125 = vmatpush1.msra.mxu0 %v70
      %126 = vmatprep.subr.mxu0 0.0
      %127 = vmatpush1.msra.mxu0 %v71
      %128 = vmatprep.subr.mxu0 0.0
      %129 = vmatpush1.msra.mxu0 %v72
      %130 = vmatprep.subr.mxu0 0.0
      %131 = vmatpush1.msra.mxu0 %v73
      %132 = vmatprep.subr.mxu0 0.0
      %133 = vmatpush1.msra.mxu0 %v74
      %134 = vmatprep.subr.mxu0 0.0
      %135 = vmatpush1.msra.mxu0 %v75
      %136 = vmatprep.subr.mxu0 0.0
      %137 = vmatpush1.msra.mxu0 %v76
      %138 = vmatprep.subr.mxu0 0.0
      %139 = vmatpush1.msra.mxu0 %v77
      %140 = vmatprep.subr.mxu0 0.0
      %141 = vmatpush1.msra.mxu0 %v78
      %142 = vmatprep.subr.mxu0 0.0
      %143 = vmatpush1.msra.mxu0 %v79
      %144 = vmatprep.subr.mxu0 0.0
      %145 = vmatpush1.msra.mxu0 %v80
      %146 = vmatprep.subr.mxu0 0.0
      %147 = vmatpush1.msra.mxu0 %v81
      %148 = vmatprep.subr.mxu0 0.0
      %149 = vmatpush1.msra.mxu0 %v82
      %150 = vmatprep.subr.mxu0 0.0
      %151 = vmatpush1.msra.mxu0 %v83
      %152 = vmatprep.subr.mxu0 0.0
      %153 = vmatpush1.msra.mxu0 %v84
      %154 = vmatprep.subr.mxu0 0.0
      %155 = vmatpush1.msra.mxu0 %v85
      %156 = vmatprep.subr.mxu0 0.0
      %157 = vmatpush1.msra.mxu0 %v86
      %158 = vmatprep.subr.mxu0 0.0
      %159 = vmatpush1.msra.mxu0 %v87
      %160 = vmatprep.subr.mxu0 0.0
      %161 = vmatpush1.msra.mxu0 %v88
      %162 = vmatprep.subr.mxu0 0.0
      %163 = vmatpush1.msra.mxu0 %v89
      %164 = vmatprep.subr.mxu0 0.0
      %165 = vmatpush1.msra.mxu0 %v90
      %166 = vmatprep.subr.mxu0 0.0
      %167 = vmatpush1.msra.mxu0 %v91
      %168 = vmatprep.mubr.f32.mxu0 %v101
      %169 = vmatmul.mubr.f32.gmra.mrb[0].mxu0 %v97
      %v170 = vpop.f32.mrb[0].mxu0
      %v171 = vadd.f32 %v92, %v170
      %v172 = vpop.f32.mrb[0].mxu0
      %173 = vdwg.mxu0
      %v174 = vtanh.pop %v171
      %175 = vst [vmem:[#allocation2] sm:$0x1] %v174
    $region37: #{tpu_custom_call.1} parent=1 // pred_fallthru
      _
    %v176 = vld [vmem:[#allocation2] sm:$0x1]
    %v177 = vld [vmem:[#allocation8] sm:$0xff]
    %v178 = vld [vmem:[#allocation8 + $0x8] sm:$0xff]
    %v179 = vld [vmem:[#allocation8 + $0x10] sm:$0xff]
    %v180 = vld [vmem:[#allocation8 + $0x18] sm:$0xff]
    %v181 = vld [vmem:[#allocation8 + $0x20] sm:$0xff]
    %v182 = vld [vmem:[#allocation8 + $0x28] sm:$0xff]
    %v183 = vld [vmem:[#allocation8 + $0x30] sm:$0xff]
    %v184 = vld [vmem:[#allocation8 + $0x38] sm:$0xff]
    %v185 = vld [vmem:[#allocation8 + $0x40] sm:$0xff]
    %v186 = vld [vmem:[#allocation8 + $0x48] sm:$0xff]
    %v187 = vld [vmem:[#allocation8 + $0x50] sm:$0xff]
    %v188 = vld [vmem:[#allocation8 + $0x58] sm:$0xff]
    %v189 = vld [vmem:[#allocation8 + $0x60] sm:$0xff]
    %v190 = vld [vmem:[#allocation8 + $0x68] sm:$0xff]
    %v191 = vld [vmem:[#allocation8 + $0x70] sm:$0xff]
    %v192 = vld [vmem:[#allocation8 + $0x78] sm:$0xff]
    %v193 = vld [vmem:[#allocation8 + $0x80] sm:$0xff]
    %v194 = vld [vmem:[#allocation8 + $0x88] sm:$0xff]
    %v195 = vld [vmem:[#allocation8 + $0x90] sm:$0xff]
    %v196 = vld [vmem:[#allocation8 + $0x98] sm:$0xff]
    %v197 = vld [vmem:[#allocation8 + $0xa0] sm:$0xff]
    %v198 = vld [vmem:[#allocation8 + $0xa8] sm:$0xff]
    %v199 = vld [vmem:[#allocation8 + $0xb0] sm:$0xff]
    %v200 = vld [vmem:[#allocation8 + $0xb8] sm:$0xff]
    %v201 = vld [vmem:[#allocation8 + $0xc0] sm:$0xff]
    %v202 = vld [vmem:[#allocation8 + $0xc8] sm:$0xff]
    %v203 = vld [vmem:[#allocation8 + $0xd0] sm:$0xff]
    %v204 = vld [vmem:[#allocation8 + $0xd8] sm:$0xff]
    %v205 = vld [vmem:[#allocation8 + $0xe0] sm:$0xff]
    %v206 = vld [vmem:[#allocation8 + $0xe8] sm:$0xff]
    %v207 = vld [vmem:[#allocation8 + $0xf0] sm:$0xff]
    %v208 = vld [vmem:[#allocation8 + $0xf8] sm:$0xff]
    %v209 = vld [vmem:[#allocation8 + $0x100] sm:$0xff]
    %v210 = vld [vmem:[#allocation8 + $0x108] sm:$0xff]
    %v211 = vld [vmem:[#allocation8 + $0x110] sm:$0xff]
    %v212 = vld [vmem:[#allocation8 + $0x118] sm:$0xff]
    %v213 = vld [vmem:[#allocation8 + $0x120] sm:$0xff]
    %v214 = vld [vmem:[#allocation8 + $0x128] sm:$0xff]
    %v215 = vld [vmem:[#allocation8 + $0x130] sm:$0xff]
    %v216 = vld [vmem:[#allocation8 + $0x138] sm:$0xff]
    %v217 = vld [vmem:[#allocation8 + $0x140] sm:$0xff]
    %v218 = vld [vmem:[#allocation8 + $0x148] sm:$0xff]
    %v219 = vld [vmem:[#allocation8 + $0x150] sm:$0xff]
    %v220 = vld [vmem:[#allocation8 + $0x158] sm:$0xff]
    %v221 = vld [vmem:[#allocation8 + $0x160] sm:$0xff]
    %v222 = vld [vmem:[#allocation8 + $0x168] sm:$0xff]
    %v223 = vld [vmem:[#allocation8 + $0x170] sm:$0xff]
    %v224 = vld [vmem:[#allocation8 + $0x178] sm:$0xff]
    %v225 = vld [vmem:[#allocation8 + $0x180] sm:$0xff]
    %v226 = vld [vmem:[#allocation8 + $0x188] sm:$0xff]
    %v227 = vld [vmem:[#allocation8 + $0x190] sm:$0xff]
    %v228 = vld [vmem:[#allocation8 + $0x198] sm:$0xff]
    %v229 = vld [vmem:[#allocation8 + $0x1a0] sm:$0xff]
    %v230 = vld [vmem:[#allocation8 + $0x1a8] sm:$0xff]
    %v231 = vld [vmem:[#allocation8 + $0x1b0] sm:$0xff]
    %v232 = vld [vmem:[#allocation8 + $0x1b8] sm:$0xff]
    %v233 = vld [vmem:[#allocation8 + $0x1c0] sm:$0xff]
    %v234 = vld [vmem:[#allocation8 + $0x1c8] sm:$0xff]
    %v235 = vld [vmem:[#allocation8 + $0x1d0] sm:$0xff]
    %v236 = vld [vmem:[#allocation8 + $0x1d8] sm:$0xff]
    %v237 = vld [vmem:[#allocation8 + $0x1e0] sm:$0xff]
    %v238 = vld [vmem:[#allocation8 + $0x1e8] sm:$0xff]
    %v239 = vld [vmem:[#allocation8 + $0x1f0] sm:$0xff]
    %v240 = vld [vmem:[#allocation8 + $0x1f8] sm:$0xff]
    %v241 = vld [vmem:[#allocation8 + $0x200] sm:$0xff]
    %v242 = vld [vmem:[#allocation8 + $0x208] sm:$0xff]
    %v243 = vld [vmem:[#allocation8 + $0x210] sm:$0xff]
    %v244 = vld [vmem:[#allocation8 + $0x218] sm:$0xff]
    %v245 = vld [vmem:[#allocation8 + $0x220] sm:$0xff]
    %v246 = vld [vmem:[#allocation8 + $0x228] sm:$0xff]
    %v247 = vld [vmem:[#allocation8 + $0x230] sm:$0xff]
    %v248 = vld [vmem:[#allocation8 + $0x238] sm:$0xff]
    %v249 = vld [vmem:[#allocation8 + $0x240] sm:$0xff]
    %v250 = vld [vmem:[#allocation8 + $0x248] sm:$0xff]
    %v251 = vld [vmem:[#allocation8 + $0x250] sm:$0xff]
    %v252 = vld [vmem:[#allocation8 + $0x258] sm:$0xff]
    %v253 = vld [vmem:[#allocation8 + $0x260] sm:$0xff]
    %v254 = vld [vmem:[#allocation8 + $0x268] sm:$0xff]
    %v255 = vld [vmem:[#allocation8 + $0x270] sm:$0xff]
    %v256 = vld [vmem:[#allocation8 + $0x278] sm:$0xff]
    %v257 = vld [vmem:[#allocation8 + $0x280] sm:$0xff]
    %v258 = vld [vmem:[#allocation8 + $0x288] sm:$0xff]
    %v259 = vld [vmem:[#allocation8 + $0x290] sm:$0xff]
    %v260 = vld [vmem:[#allocation8 + $0x298] sm:$0xff]
    %v261 = vld [vmem:[#allocation8 + $0x2a0] sm:$0xff]
    %v262 = vld [vmem:[#allocation8 + $0x2a8] sm:$0xff]
    %v263 = vld [vmem:[#allocation8 + $0x2b0] sm:$0xff]
    %v264 = vld [vmem:[#allocation8 + $0x2b8] sm:$0xff]
    %v265 = vld [vmem:[#allocation8 + $0x2c0] sm:$0xff]
    %v266 = vld [vmem:[#allocation8 + $0x2c8] sm:$0xff]
    %v267 = vld [vmem:[#allocation8 + $0x2d0] sm:$0xff]
    %v268 = vld [vmem:[#allocation8 + $0x2d8] sm:$0xff]
    %v269 = vld [vmem:[#allocation8 + $0x2e0] sm:$0xff]
    %v270 = vld [vmem:[#allocation8 + $0x2e8] sm:$0xff]
    %v271 = vld [vmem:[#allocation8 + $0x2f0] sm:$0xff]
    %v272 = vld [vmem:[#allocation8 + $0x2f8] sm:$0xff]
    %v273 = vld [vmem:[#allocation8 + $0x300] sm:$0xff]
    %v274 = vld [vmem:[#allocation8 + $0x308] sm:$0xff]
    %v275 = vld [vmem:[#allocation8 + $0x310] sm:$0xff]
    %v276 = vld [vmem:[#allocation8 + $0x318] sm:$0xff]
    %v277 = vld [vmem:[#allocation8 + $0x320] sm:$0xff]
    %v278 = vld [vmem:[#allocation8 + $0x328] sm:$0xff]
    %v279 = vld [vmem:[#allocation8 + $0x330] sm:$0xff]
    %v280 = vld [vmem:[#allocation8 + $0x338] sm:$0xff]
    %v281 = vld [vmem:[#allocation8 + $0x340] sm:$0xff]
    %v282 = vld [vmem:[#allocation8 + $0x348] sm:$0xff]
    %v283 = vld [vmem:[#allocation8 + $0x350] sm:$0xff]
    %v284 = vld [vmem:[#allocation8 + $0x358] sm:$0xff]
    %v285 = vld [vmem:[#allocation8 + $0x360] sm:$0xff]
    %v286 = vld [vmem:[#allocation8 + $0x368] sm:$0xff]
    %v287 = vld [vmem:[#allocation8 + $0x370] sm:$0xff]
    %v288 = vld [vmem:[#allocation8 + $0x378] sm:$0xff]
    %v289 = vld [vmem:[%s5] sm:$0xff]
    %v291 = vlaneseq
    %v292 = vshrl.u32 %v291, 7
    %v293 = vsub.s32 0, %v292
    %v294 = vrot.slane %v289, %v293
    %v295 = vlaneseq
    %v296 = vshrl.u32 %v295, 7
    %v297 = vsub.s32 1, %v296
    %v298 = vrot.slane %v289, %v297
    %v299 = vlaneseq
    %v300 = vshrl.u32 %v299, 7
    %v301 = vsub.s32 2, %v300
    %v302 = vrot.slane %v289, %v301
    %v303 = vlaneseq
    %v304 = vshrl.u32 %v303, 7
    %v305 = vsub.s32 3, %v304
    %v306 = vrot.slane %v289, %v305
    %v307 = vlaneseq
    %v308 = vshrl.u32 %v307, 7
    %v309 = vsub.s32 4, %v308
    %v310 = vrot.slane %v289, %v309
    %v311 = vlaneseq
    %v312 = vshrl.u32 %v311, 7
    %v313 = vsub.s32 5, %v312
    %v314 = vrot.slane %v289, %v313
    %v315 = vlaneseq
    %v316 = vshrl.u32 %v315, 7
    %v317 = vsub.s32 6, %v316
    %v318 = vrot.slane %v289, %v317
    %326 = vmatprep.subr.mxu0 %v178
    %327 = vmatpush1.msra.mxu0 %v177
    %328 = vmatprep.subr.mxu0 %v185
    %329 = vmatpush1.msra.mxu0 %v184
    %330 = vmatprep.subr.mxu0 %v192
    %331 = vmatpush1.msra.mxu0 %v191
    %332 = vmatprep.subr.mxu0 %v199
    %333 = vmatpush1.msra.mxu0 %v198
    %334 = vmatprep.subr.mxu0 %v206
    %335 = vmatpush1.msra.mxu0 %v205
    %336 = vmatprep.subr.mxu0 %v213
    %337 = vmatpush1.msra.mxu0 %v212
    %338 = vmatprep.subr.mxu0 %v220
    %339 = vmatpush1.msra.mxu0 %v219
    %340 = vmatprep.subr.mxu0 %v227
    %341 = vmatpush1.msra.mxu0 %v226
    %342 = vmatprep.subr.mxu0 %v234
    %343 = vmatpush1.msra.mxu0 %v233
    %344 = vmatprep.subr.mxu0 %v241
    %345 = vmatpush1.msra.mxu0 %v240
    %346 = vmatprep.subr.mxu0 %v248
    %347 = vmatpush1.msra.mxu0 %v247
    %348 = vmatprep.subr.mxu0 %v255
    %349 = vmatpush1.msra.mxu0 %v254
    %350 = vmatprep.subr.mxu0 %v262
    %351 = vmatpush1.msra.mxu0 %v261
    %352 = vmatprep.subr.mxu0 %v269
    %353 = vmatpush1.msra.mxu0 %v268
    %354 = vmatprep.subr.mxu0 %v276
    %355 = vmatpush1.msra.mxu0 %v275
    %356 = vmatprep.subr.mxu0 %v283
    %357 = vmatpush1.msra.mxu0 %v282
    %358 = vmatprep.subr.mxu0 0.0
    %359 = vmatpush1.msra.mxu0 0.0
    %360 = vmatprep.subr.mxu0 0.0
    %361 = vmatpush1.msra.mxu0 0.0
    %362 = vmatprep.subr.mxu0 0.0
    %363 = vmatpush1.msra.mxu0 0.0
    %364 = vmatprep.subr.mxu0 0.0
    %365 = vmatpush1.msra.mxu0 0.0
    %366 = vmatprep.subr.mxu0 0.0
    %367 = vmatpush1.msra.mxu0 0.0
    %368 = vmatprep.subr.mxu0 0.0
    %369 = vmatpush1.msra.mxu0 0.0
    %370 = vmatprep.subr.mxu0 0.0
    %371 = vmatpush1.msra.mxu0 0.0
    %372 = vmatprep.subr.mxu0 0.0
    %373 = vmatpush1.msra.mxu0 0.0
    %374 = vmatprep.subr.mxu0 0.0
    %375 = vmatpush1.msra.mxu0 0.0
    %376 = vmatprep.subr.mxu0 0.0
    %377 = vmatpush1.msra.mxu0 0.0
    %378 = vmatprep.subr.mxu0 0.0
    %379 = vmatpush1.msra.mxu0 0.0
    %380 = vmatprep.subr.mxu0 0.0
    %381 = vmatpush1.msra.mxu0 0.0
    %382 = vmatprep.subr.mxu0 0.0
    %383 = vmatpush1.msra.mxu0 0.0
    %384 = vmatprep.subr.mxu0 0.0
    %385 = vmatpush1.msra.mxu0 0.0
    %386 = vmatprep.subr.mxu0 0.0
    %387 = vmatpush1.msra.mxu0 0.0
    %388 = vmatprep.subr.mxu0 0.0
    %389 = vmatpush1.msra.mxu0 0.0
    %390 = vmatprep.mubr.f32.mxu0 0.0
    %391 = vmatmul.mubr.f32.gmra.mrb[0].mxu0 %v176
    %v392 = vpop.f32.mrb[0].mxu0
    %v393 = vadd.f32 %v294, %v392
    %v394 = vpop.f32.mrb[0].mxu0
    %v395 = vadd.f32 %v298, %v394
    %396 = vdwg.mxu0
    %397 = vmatprep.subr.mxu0 %v180
    %398 = vmatpush1.msra.mxu0 %v179
    %399 = vmatprep.subr.mxu0 %v187
    %400 = vmatpush1.msra.mxu0 %v186
    %401 = vmatprep.subr.mxu0 %v194
    %402 = vmatpush1.msra.mxu0 %v193
    %403 = vmatprep.subr.mxu0 %v201
    %404 = vmatpush1.msra.mxu0 %v200
    %405 = vmatprep.subr.mxu0 %v208
    %406 = vmatpush1.msra.mxu0 %v207
    %407 = vmatprep.subr.mxu0 %v215
    %408 = vmatpush1.msra.mxu0 %v214
    %409 = vmatprep.subr.mxu0 %v222
    %410 = vmatpush1.msra.mxu0 %v221
    %411 = vmatprep.subr.mxu0 %v229
    %412 = vmatpush1.msra.mxu0 %v228
    %413 = vmatprep.subr.mxu0 %v236
    %414 = vmatpush1.msra.mxu0 %v235
    %415 = vmatprep.subr.mxu0 %v243
    %416 = vmatpush1.msra.mxu0 %v242
    %417 = vmatprep.subr.mxu0 %v250
    %418 = vmatpush1.msra.mxu0 %v249
    %419 = vmatprep.subr.mxu0 %v257
    %420 = vmatpush1.msra.mxu0 %v256
    %421 = vmatprep.subr.mxu0 %v264
    %422 = vmatpush1.msra.mxu0 %v263
    %423 = vmatprep.subr.mxu0 %v271
    %424 = vmatpush1.msra.mxu0 %v270
    %425 = vmatprep.subr.mxu0 %v278
    %426 = vmatpush1.msra.mxu0 %v277
    %427 = vmatprep.subr.mxu0 %v285
    %428 = vmatpush1.msra.mxu0 %v284
    %429 = vmatprep.subr.mxu0 0.0
    %430 = vmatpush1.msra.mxu0 0.0
    %431 = vmatprep.subr.mxu0 0.0
    %432 = vmatpush1.msra.mxu0 0.0
    %433 = vmatprep.subr.mxu0 0.0
    %434 = vmatpush1.msra.mxu0 0.0
    %435 = vmatprep.subr.mxu0 0.0
    %436 = vmatpush1.msra.mxu0 0.0
    %437 = vmatprep.subr.mxu0 0.0
    %438 = vmatpush1.msra.mxu0 0.0
    %439 = vmatprep.subr.mxu0 0.0
    %440 = vmatpush1.msra.mxu0 0.0
    %441 = vmatprep.subr.mxu0 0.0
    %442 = vmatpush1.msra.mxu0 0.0
    %443 = vmatprep.subr.mxu0 0.0
    %444 = vmatpush1.msra.mxu0 0.0
    %445 = vmatprep.subr.mxu0 0.0
    %446 = vmatpush1.msra.mxu0 0.0
    %447 = vmatprep.subr.mxu0 0.0
    %448 = vmatpush1.msra.mxu0 0.0
    %449 = vmatprep.subr.mxu0 0.0
    %450 = vmatpush1.msra.mxu0 0.0
    %451 = vmatprep.subr.mxu0 0.0
    %452 = vmatpush1.msra.mxu0 0.0
    %453 = vmatprep.subr.mxu0 0.0
    %454 = vmatpush1.msra.mxu0 0.0
    %455 = vmatprep.subr.mxu0 0.0
    %456 = vmatpush1.msra.mxu0 0.0
    %457 = vmatprep.subr.mxu0 0.0
    %458 = vmatpush1.msra.mxu0 0.0
    %459 = vmatprep.subr.mxu0 0.0
    %460 = vmatpush1.msra.mxu0 0.0
    %461 = vmatprep.mubr.f32.mxu0 0.0
    %462 = vmatmul.mubr.f32.gmra.mrb[0].mxu0 %v176
    %v463 = vpop.f32.mrb[0].mxu0
    %v464 = vadd.f32 %v302, %v463
    %v465 = vpop.f32.mrb[0].mxu0
    %v466 = vadd.f32 %v306, %v465
    %467 = vdwg.mxu0
    %468 = vmatprep.subr.mxu0 %v182
    %469 = vmatpush1.msra.mxu0 %v181
    %470 = vmatprep.subr.mxu0 %v189
    %471 = vmatpush1.msra.mxu0 %v188
    %472 = vmatprep.subr.mxu0 %v196
    %473 = vmatpush1.msra.mxu0 %v195
    %474 = vmatprep.subr.mxu0 %v203
    %475 = vmatpush1.msra.mxu0 %v202
    %476 = vmatprep.subr.mxu0 %v210
    %477 = vmatpush1.msra.mxu0 %v209
    %478 = vmatprep.subr.mxu0 %v217
    %479 = vmatpush1.msra.mxu0 %v216
    %480 = vmatprep.subr.mxu0 %v224
    %481 = vmatpush1.msra.mxu0 %v223
    %482 = vmatprep.subr.mxu0 %v231
    %483 = vmatpush1.msra.mxu0 %v230
    %484 = vmatprep.subr.mxu0 %v238
    %485 = vmatpush1.msra.mxu0 %v237
    %486 = vmatprep.subr.mxu0 %v245
    %487 = vmatpush1.msra.mxu0 %v244
    %488 = vmatprep.subr.mxu0 %v252
    %489 = vmatpush1.msra.mxu0 %v251
    %490 = vmatprep.subr.mxu0 %v259
    %491 = vmatpush1.msra.mxu0 %v258
    %492 = vmatprep.subr.mxu0 %v266
    %493 = vmatpush1.msra.mxu0 %v265
    %494 = vmatprep.subr.mxu0 %v273
    %495 = vmatpush1.msra.mxu0 %v272
    %496 = vmatprep.subr.mxu0 %v280
    %497 = vmatpush1.msra.mxu0 %v279
    %498 = vmatprep.subr.mxu0 %v287
    %499 = vmatpush1.msra.mxu0 %v286
    %500 = vmatprep.subr.mxu0 0.0
    %501 = vmatpush1.msra.mxu0 0.0
    %502 = vmatprep.subr.mxu0 0.0
    %503 = vmatpush1.msra.mxu0 0.0
    %504 = vmatprep.subr.mxu0 0.0
    %505 = vmatpush1.msra.mxu0 0.0
    %506 = vmatprep.subr.mxu0 0.0
    %507 = vmatpush1.msra.mxu0 0.0
    %508 = vmatprep.subr.mxu0 0.0
    %509 = vmatpush1.msra.mxu0 0.0
    %510 = vmatprep.subr.mxu0 0.0
    %511 = vmatpush1.msra.mxu0 0.0
    %512 = vmatprep.subr.mxu0 0.0
    %513 = vmatpush1.msra.mxu0 0.0
    %514 = vmatprep.subr.mxu0 0.0
    %515 = vmatpush1.msra.mxu0 0.0
    %516 = vmatprep.subr.mxu0 0.0
    %517 = vmatpush1.msra.mxu0 0.0
    %518 = vmatprep.subr.mxu0 0.0
    %519 = vmatpush1.msra.mxu0 0.0
    %520 = vmatprep.subr.mxu0 0.0
    %521 = vmatpush1.msra.mxu0 0.0
    %522 = vmatprep.subr.mxu0 0.0
    %523 = vmatpush1.msra.mxu0 0.0
    %524 = vmatprep.subr.mxu0 0.0
    %525 = vmatpush1.msra.mxu0 0.0
    %526 = vmatprep.subr.mxu0 0.0
    %527 = vmatpush1.msra.mxu0 0.0
    %528 = vmatprep.subr.mxu0 0.0
    %529 = vmatpush1.msra.mxu0 0.0
    %530 = vmatprep.subr.mxu0 0.0
    %531 = vmatpush1.msra.mxu0 0.0
    %532 = vmatprep.mubr.f32.mxu0 0.0
    %533 = vmatmul.mubr.f32.gmra.mrb[0].mxu0 %v176
    %v534 = vpop.f32.mrb[0].mxu0
    %v535 = vadd.f32 %v310, %v534
    %v536 = vpop.f32.mrb[0].mxu0
    %v537 = vadd.f32 %v314, %v536
    %538 = vdwg.mxu0
    %539 = vmatprep.subr.mxu0 0.0
    %540 = vmatpush1.msra.mxu0 %v183
    %541 = vmatprep.subr.mxu0 0.0
    %542 = vmatpush1.msra.mxu0 %v190
    %543 = vmatprep.subr.mxu0 0.0
    %544 = vmatpush1.msra.mxu0 %v197
    %545 = vmatprep.subr.mxu0 0.0
    %546 = vmatpush1.msra.mxu0 %v204
    %547 = vmatprep.subr.mxu0 0.0
    %548 = vmatpush1.msra.mxu0 %v211
    %549 = vmatprep.subr.mxu0 0.0
    %550 = vmatpush1.msra.mxu0 %v218
    %551 = vmatprep.subr.mxu0 0.0
    %552 = vmatpush1.msra.mxu0 %v225
    %553 = vmatprep.subr.mxu0 0.0
    %554 = vmatpush1.msra.mxu0 %v232
    %555 = vmatprep.subr.mxu0 0.0
    %556 = vmatpush1.msra.mxu0 %v239
    %557 = vmatprep.subr.mxu0 0.0
    %558 = vmatpush1.msra.mxu0 %v246
    %559 = vmatprep.subr.mxu0 0.0
    %560 = vmatpush1.msra.mxu0 %v253
    %561 = vmatprep.subr.mxu0 0.0
    %562 = vmatpush1.msra.mxu0 %v260
    %563 = vmatprep.subr.mxu0 0.0
    %564 = vmatpush1.msra.mxu0 %v267
    %565 = vmatprep.subr.mxu0 0.0
    %566 = vmatpush1.msra.mxu0 %v274
    %567 = vmatprep.subr.mxu0 0.0
    %568 = vmatpush1.msra.mxu0 %v281
    %569 = vmatprep.subr.mxu0 0.0
    %570 = vmatpush1.msra.mxu0 %v288
    %571 = vmatprep.subr.mxu0 0.0
    %572 = vmatpush1.msra.mxu0 0.0
    %573 = vmatprep.subr.mxu0 0.0
    %574 = vmatpush1.msra.mxu0 0.0
    %575 = vmatprep.subr.mxu0 0.0
    %576 = vmatpush1.msra.mxu0 0.0
    %577 = vmatprep.subr.mxu0 0.0
    %578 = vmatpush1.msra.mxu0 0.0
    %579 = vmatprep.subr.mxu0 0.0
    %580 = vmatpush1.msra.mxu0 0.0
    %581 = vmatprep.subr.mxu0 0.0
    %582 = vmatpush1.msra.mxu0 0.0
    %583 = vmatprep.subr.mxu0 0.0
    %584 = vmatpush1.msra.mxu0 0.0
    %585 = vmatprep.subr.mxu0 0.0
    %586 = vmatpush1.msra.mxu0 0.0
    %587 = vmatprep.subr.mxu0 0.0
    %588 = vmatpush1.msra.mxu0 0.0
    %589 = vmatprep.subr.mxu0 0.0
    %590 = vmatpush1.msra.mxu0 0.0
    %591 = vmatprep.subr.mxu0 0.0
    %592 = vmatpush1.msra.mxu0 0.0
    %593 = vmatprep.subr.mxu0 0.0
    %594 = vmatpush1.msra.mxu0 0.0
    %595 = vmatprep.subr.mxu0 0.0
    %596 = vmatpush1.msra.mxu0 0.0
    %597 = vmatprep.subr.mxu0 0.0
    %598 = vmatpush1.msra.mxu0 0.0
    %599 = vmatprep.subr.mxu0 0.0
    %600 = vmatpush1.msra.mxu0 0.0
    %601 = vmatprep.subr.mxu0 0.0
    %602 = vmatpush1.msra.mxu0 0.0
    %603 = vmatprep.mubr.f32.mxu0 0.0
    %604 = vmatmul.mubr.f32.gmra.mrb[0].mxu0 %v176
    %v605 = vpop.f32.mrb[0].mxu0
    %v606 = vadd.f32 %v318, %v605
    %v607 = vpop.f32.mrb[0].mxu0
    %608 = vdwg.mxu0
    %s609 = smul.u32 0, 896
    %v617 = vcombine.low %v393, %v395
    %v618 = vcombine.low %v464, %v466
    %v619 = vcombine.low %v535, %v537
    %v621 = vunpack.c.l.s4 1966171168
    %v622 = vunpack.c.0.s8 %v621
    %v623 = vlaneseq
    %v624 = vshrl.u32 %v623, 7
    %v625 = vsub.s32 %v622, %v624
    %v626 = vrot.slane %v617, %v625
    %v628 = vunpack.c.l.s4 1966171168
    %v629 = vunpack.c.0.s8 %v628
    %v630 = vlaneseq
    %v631 = vshrl.u32 %v630, 7
    %v632 = vsub.s32 %v629, %v631
    %v633 = vrot.slane %v618, %v632
    %v635 = vunpack.c.l.s4 1966171168
    %v636 = vunpack.c.0.s8 %v635
    %v637 = vlaneseq
    %v638 = vshrl.u32 %v637, 7
    %v639 = vsub.s32 %v636, %v638
    %v640 = vrot.slane %v619, %v639
    %v642 = vunpack.c.l.s4 1966171168
    %v643 = vunpack.c.0.s8 %v642
    %v644 = vlaneseq
    %v645 = vshrl.u32 %v644, 7
    %v646 = vsub.s32 %v643, %v645
    %v647 = vrot.slane %v606, %v646
    %v648 = vcombine.low %v626, %v633
    %v649 = vcombine.low %v640, %v647
    %v651 = vunpack.c.l.s4 1966171168
    %v652 = vunpack.c.0.s8 %v651
    %v653 = vlaneseq
    %v654 = vshrl.u32 %v653, 7
    %v655 = vsub.s32 %v652, %v654
    %v656 = vrot.slane %v648, %v655
    %v658 = vunpack.c.l.s4 1966171168
    %v659 = vunpack.c.0.s8 %v658
    %v660 = vlaneseq
    %v661 = vshrl.u32 %v660, 7
    %v662 = vsub.s32 %v659, %v661
    %v663 = vrot.slane %v649, %v662
    %v664 = vcombine.low %v656, %v663
    %s666 = sshra.s32 %s609, 7
    %s667 = sand.u32 %s609, 127
    %s668 = scalar_lea.vmem [#allocation3], %s666
    %v669 = vlaneseq
    %vm670 = vcmp.ge.s32.totalorder %v669, 0
    %vm671 = vcmp.lt.s32.totalorder %v669, 896
    %vm672 = vmand %vm670, %vm671
    %673 = vst.msk [vmem:[%s668] sm:$0x7f] %vm672, %v664
    // Predicated region
    $region38: #{tpu_custom_call.1} parent=1 // pred_check
      %p674 = pneg %p55
    $region39: #{tpu_custom_call.1} parent=1 // pred_check_branch
      %676 = sbr.rel (%p674) target = $region41
    $region40: #{tpu_custom_call.1} parent=1 // pred_region
      %v677 = vld [vmem:[#allocation3] sm:$0x3]
      %v678 = vld [vmem:[#allocation3 + $0x2] sm:$0x1]
      %v679 = vld [vmem:[#allocation3 + $0x3] sm:$0x3]
      %v680 = vld [vmem:[#allocation3 + $0x5] sm:$0x1]
      %v681 = vld [vmem:[#allocation3 + $0x6] sm:$0x1]
      %s682 = sld [smem:[#allocation4]]
      %v683 = vxor.u32 %v681, 2147483648
      %v684 = vmul.f32 %v683, 1.442695
      %v685 = vpow.pop %v684
      %v686 = vadd.f32 %v685, 1.0
      %v687 = vrcp.pop %v686
      %v688 = vmul.f32 1.0, %v687
      %v689 = vstv %s682
      %v690 = vmul.f32 %v689, %v688
      %vm691 = vcmp.lt.s32.totalorder %v669, 256
      %vm692 = vmand %vm670, %vm691
      %693 = vst.msk [vmem:[#allocation10] ss:$2 sm:$0x3] %vm692, %v677
      %s694 = scalar_lea.vmem [#allocation10], 1
      %695 = vst.msk [vmem:[%s694] ss:$2 sm:$0x3] %vm692, %v679
      %vm696 = vcmask 57344
      %v697 = vsel %vm696, %v678, -inf
      %698 = vmax.xlane.f32.xlu0 %v697
      %v699 = vpop.xlane.xlu0 %698
      %v700 = vsub.f32 %v678, %v699
      %v701 = vmul.f32 %v700, 1.442695
      %v702 = vpow.pop %v701
      %v703 = vsel %vm696, %v702, 0.0
      %704 = vadd.xlane.f32.xlu0 %v703
      %v705 = vpop.xlane.xlu0 %704
      %v706 = vrcp.pop %v705
      %v707 = vmul.f32 %v702, %v706
      %708 = vxpose.xlu0.b32.start [1/16] %v707, 128
      %709 = vxpose.xlu0.b32.cont [2/16] 0.0, 128
      %710 = vxpose.xlu0.b32.cont [3/16] 0.0, 128
      %711 = vxpose.xlu0.b32.cont [4/16] 0.0, 128
      %712 = vxpose.xlu0.b32.cont [5/16] 0.0, 128
      %713 = vxpose.xlu0.b32.cont [6/16] 0.0, 128
      %714 = vxpose.xlu0.b32.cont [7/16] 0.0, 128
      %715 = vxpose.xlu0.b32.cont [8/16] 0.0, 128
      %716 = vxpose.xlu0.b32.cont [9/16] 0.0, 128
      %717 = vxpose.xlu0.b32.cont [10/16] 0.0, 128
      %718 = vxpose.xlu0.b32.cont [11/16] 0.0, 128
      %719 = vxpose.xlu0.b32.cont [12/16] 0.0, 128
      %720 = vxpose.xlu0.b32.cont [13/16] 0.0, 128
      %721 = vxpose.xlu0.b32.cont [14/16] 0.0, 128
      %722 = vxpose.xlu0.b32.cont [15/16] 0.0, 128
      %723 = vxpose.xlu0.b32.end [16/16] 0.0, 128
      %v724 = vpop.trf.xlu0
      %v725 = vpop.trf.xlu0
      %v726 = vpop.trf.xlu0
      %v727 = vpop.trf.xlu0
      %v728 = vpop.trf.xlu0
      %v729 = vpop.trf.xlu0
      %v730 = vpop.trf.xlu0
      %v731 = vpop.trf.xlu0
      %v732 = vpop.trf.xlu0
      %v733 = vpop.trf.xlu0
      %v734 = vpop.trf.xlu0
      %v735 = vpop.trf.xlu0
      %v736 = vpop.trf.xlu0
      %v737 = vpop.trf.xlu0
      %v738 = vpop.trf.xlu0
      %v739 = vpop.trf.xlu0
      %v741 = vlaneseq
      %v742 = vshrl.u32 %v741, 7
      %v743 = vsub.s32 0, %v742
      %v744 = vrot.slane %v690, %v743
      %v746 = vmul.f32 %v724, %v744
      %vm747 = vcmask 7168
      %748 = vst.msk [vmem:[%s7] sm:$0xff] %vm747, %v746
      %v749 = vsel %vm696, %v680, -inf
      %750 = vmax.xlane.f32.xlu0 %v749
      %v751 = vpop.xlane.xlu0 %750
      %v752 = vsub.f32 %v680, %v751
      %v753 = vmul.f32 %v752, 1.442695
      %v754 = vpow.pop %v753
      %v755 = vsel %vm696, %v754, 0.0
      %756 = vadd.xlane.f32.xlu0 %v755
      %v757 = vpop.xlane.xlu0 %756
      %v758 = vrcp.pop %v757
      %v759 = vmul.f32 %v754, %v758
      %760 = vxpose.xlu0.b32.start [1/16] %v759, 128
      %761 = vxpose.xlu0.b32.cont [2/16] 0.0, 128
      %762 = vxpose.xlu0.b32.cont [3/16] 0.0, 128
      %763 = vxpose.xlu0.b32.cont [4/16] 0.0, 128
      %764 = vxpose.xlu0.b32.cont [5/16] 0.0, 128
      %765 = vxpose.xlu0.b32.cont [6/16] 0.0, 128
      %766 = vxpose.xlu0.b32.cont [7/16] 0.0, 128
      %767 = vxpose.xlu0.b32.cont [8/16] 0.0, 128
      %768 = vxpose.xlu0.b32.cont [9/16] 0.0, 128
      %769 = vxpose.xlu0.b32.cont [10/16] 0.0, 128
      %770 = vxpose.xlu0.b32.cont [11/16] 0.0, 128
      %771 = vxpose.xlu0.b32.cont [12/16] 0.0, 128
      %772 = vxpose.xlu0.b32.cont [13/16] 0.0, 128
      %773 = vxpose.xlu0.b32.cont [14/16] 0.0, 128
      %774 = vxpose.xlu0.b32.cont [15/16] 0.0, 128
      %775 = vxpose.xlu0.b32.end [16/16] 0.0, 128
      %v776 = vpop.trf.xlu0
      %v777 = vpop.trf.xlu0
      %v778 = vpop.trf.xlu0
      %v779 = vpop.trf.xlu0
      %v780 = vpop.trf.xlu0
      %v781 = vpop.trf.xlu0
      %v782 = vpop.trf.xlu0
      %v783 = vpop.trf.xlu0
      %v784 = vpop.trf.xlu0
      %v785 = vpop.trf.xlu0
      %v786 = vpop.trf.xlu0
      %v787 = vpop.trf.xlu0
      %v788 = vpop.trf.xlu0
      %v789 = vpop.trf.xlu0
      %v790 = vpop.trf.xlu0
      %v791 = vpop.trf.xlu0
      %v792 = vmul.f32 %v776, %v744
      %794 = vrot.lane.b32.xlu0 %v792, 1
      %v795 = vpop.permute.xlu0 %794
      %vm797 = vcmask 15368
      %798 = vst.msk [vmem:[%s7] sm:$0xff] %vm797, %v795
    $region41: #{tpu_custom_call.1} parent=1 // pred_fallthru
      _
    // Predicated region
    $region42: #{tpu_custom_call.1} parent=1 // pred_check
      _
    $region43: #{tpu_custom_call.1} parent=1 // pred_check_branch
      %800 = sbr.rel (0) target = $region45
    $region44: #{tpu_custom_call.1} parent=1 // pred_region
      %s802 = ssub.s32 64, 64
      %803 = vsyncadd [#allocation7], %s802
      %s805 = sshll.u32 [#allocation10], 4
      %s806 = int_to_ptr.vmem [resolvable:$true] %s805
      %808 = dma.vmem_to_hbm [thread:$0]  %s806, 64, %s6, [#allocation7]
    $region45: #{tpu_custom_call.1} parent=1 // pred_fallthru
      _
    // Predicated region
    $region46: #{tpu_custom_call.1} parent=1 // pred_check
      _
    $region47: #{tpu_custom_call.1} parent=1 // pred_check_branch
      %810 = sbr.rel (0) target = $region49
    $region48: #{tpu_custom_call.1} parent=1 // pred_region
      _
    $region49: #{tpu_custom_call.1} parent=1 // pred_fallthru
      _
    // Predicated region
    $region50: #{tpu_custom_call.1} parent=1 // pred_check
      _
    $region51: #{tpu_custom_call.1} parent=1 // pred_check_branch
      %812 = sbr.rel (0) target = $region53
    $region52: #{tpu_custom_call.1} parent=1 // pred_region
      %813 = dma.done [#allocation7], 64
    $region53: #{tpu_custom_call.1} parent=1 // pred_fallthru
      _
    // Predicated region
    $region54: #{tpu_custom_call.1} parent=1 // pred_check
      _
    $region55: #{tpu_custom_call.1} parent=1 // pred_check_branch
      %815 = sbr.rel (0) target = $region57
    $region56: #{tpu_custom_call.1} parent=1 // pred_region
      _
    $region57: #{tpu_custom_call.1} parent=1 // pred_fallthru
      _
    %816 = vsyncpa [#allocation6], 1
    %817 = vsyncpa [#allocation9], 1
    %818 = vsyncpa [#allocation7], 1

</llo_original>
